<compile_context>
chip_gen: v6e
topology: v6e:2x2x1
jax: 0.10.0
libtpu: 0.0.40
codegen_flags: <defaults>
</compile_context>

<pallas_src>
import functools

import jax
import jax.numpy as jnp
from jax.experimental import pallas as pl
from jax.experimental.pallas import tpu as pltpu

VOCAB = 64
DIM = 128
VOCAB_PAD = 128  # pad contraction axis to full 128-lane width


def _embedding_kernel(idx_ref, table_ref, out_ref):
    # idx_ref:   (block_n, 1)        int32
    # table_ref: (VOCAB_PAD, DIM)    float32 (rows >= VOCAB are zero)
    # out_ref:   (block_n, DIM)      float32
    ids = idx_ref[...]                                              # (block_n, 1)
    n = ids.shape[0]
    iota = jax.lax.broadcasted_iota(jnp.int32, (n, VOCAB_PAD), 1)   # (block_n, 128)
    onehot = (ids == iota).astype(table_ref.dtype)                  # lane-dense
    # Full-depth K=128 MXU pass; HIGHEST keeps the f32 table untruncated.
    out_ref[...] = jnp.dot(
        onehot,
        table_ref[...],
        preferred_element_type=jnp.float32,
        precision=jax.lax.Precision.HIGHEST,
    )


def _pick_block_n(n, cap=2048):
    """Multiple-of-8 row block, <= cap, with >= 2 grid blocks when n allows."""
    n8 = ((n + 7) // 8) * 8
    if n8 >= 16:
        half = ((pl.cdiv(n8, 2) + 7) // 8) * 8  # split across >= 2 cores
        return min(cap, half)
    return n8


@functools.partial(jax.jit, static_argnames=("block_n",))
def embedding_lookup(idx, table_pad, *, block_n=None):
    """idx: (B, S) int in [0, VOCAB); table_pad: (VOCAB_PAD, DIM) f32 -> (B, S, DIM) f32."""
    B, S = idx.shape
    n = B * S
    if block_n is None:
        block_n = _pick_block_n(n)

    idx2d = idx.reshape(n, 1).astype(jnp.int32)

    grid = (pl.cdiv(n, block_n),)
    out = pl.pallas_call(
        _embedding_kernel,
        out_shape=jax.ShapeDtypeStruct((n, DIM), table_pad.dtype),
        grid_spec=pltpu.PrefetchScalarGridSpec(
            num_scalar_prefetch=0,
            grid=grid,
            in_specs=[
                # Streamed index block per grid step (ragged last block OK).
                pl.BlockSpec((block_n, 1), lambda i: (i, 0)),
                # Table resident in VMEM across the whole grid.
                pl.BlockSpec((VOCAB_PAD, DIM), lambda i: (0, 0)),
            ],
            out_specs=pl.BlockSpec((block_n, DIM), lambda i: (i, 0)),
        ),
        compiler_params=pltpu.CompilerParams(
            dimension_semantics=("parallel",),
        ),
    )(idx2d, table_pad)

    return out.reshape(B, S, DIM)


class M:
    """JAX/Pallas port of the PyTorch module M (nn.Embedding(64, 128))."""

    def __init__(self, key):
        # PyTorch default init for Embedding weight is N(0, 1).
        self.emb_weight = jax.random.normal(key, (VOCAB, DIM), dtype=jnp.float32)
        # Hoisted out of forward: pad vocab 64 -> 128 once (padded rows zero).
        self._table_pad = jnp.pad(self.emb_weight, ((0, VOCAB_PAD - VOCAB), (0, 0)))

    def forward(self, idx, x):
        # `x` is unused, exactly like the reference forward.
        return embedding_lookup(idx, self._table_pad)


if __name__ == "__main__":
    root = jax.random.PRNGKey(0)
    k_idx, k_x, k_w = jax.random.split(root, 3)

    # idx = torch.randint(0, 64, (4, 32))
    idx = jax.random.randint(k_idx, (4, 32), 0, VOCAB, dtype=jnp.int32)
    # `x` is an arbitrary (unused) second input; small shape.
    x = jax.random.normal(k_x, (2, 4, 16, 16), dtype=jnp.float32)

    model = M(k_w)
    out = model.forward(idx, x)
    out = jax.block_until_ready(out)

    # Sanity check against a pure-JAX reference gather.
    ref = jnp.take(model.emb_weight, idx, axis=0)
    assert out.shape == (4, 32, 128), out.shape
    assert jnp.allclose(out, ref, atol=1e-6), "mismatch vs reference gather"

    print("KERNEL_OK")
</pallas_src>

<mosaic_0001>
module attributes {stable_mosaic.version = 11 : i64} {
  func.func @_embedding_kernel(%arg0: i32, %arg1: memref<64x1xi32, #tpu.memory_space<vmem>>, %arg2: memref<128x128xf32, #tpu.memory_space<vmem>>, %arg3: memref<64x128xf32, #tpu.memory_space<vmem>>) attributes {dimension_semantics = [#tpu.dimension_semantics<parallel>], iteration_bounds = array<i64: 2>, scalar_prefetch = 0 : i64, scratch_operands = 0 : i64, tpu.core_type = #tpu.core_type<tc>, window_params = [{transform_indices = @transform_0, window_bounds = array<i64: 64, 1>}, {pipeline_mode = #tpu.pipeline_mode<synchronous>, transform_indices = @transform_1, window_bounds = array<i64: 128, 128>}, {transform_indices = @transform_2, window_bounds = array<i64: 64, 128>}]} {
    %c0 = arith.constant 0 : index
    %c0_0 = arith.constant 0 : index
    %0 = vector.load %arg1[%c0, %c0_0] : memref<64x1xi32, #tpu.memory_space<vmem>>, vector<64x1xi32>
    %1 = tpu.iota {dimensions = array<i32: 1>} : vector<64x128xi32>
    %2 = vector.broadcast %0 : vector<64x1xi32> to vector<64x128xi32>
    %3 = arith.cmpi eq, %2, %1 : vector<64x128xi32>
    %4 = arith.extui %3 : vector<64x128xi1> to vector<64x128xi32>
    %5 = arith.sitofp %4 : vector<64x128xi32> to vector<64x128xf32>
    %c0_1 = arith.constant 0 : index
    %c0_2 = arith.constant 0 : index
    %6 = vector.load %arg2[%c0_1, %c0_2] : memref<128x128xf32, #tpu.memory_space<vmem>>, vector<128x128xf32>
    %cst = arith.constant dense<0.000000e+00> : vector<64x128xf32>
    %7 = tpu.matmul %5, %6, %cst {dimension_numbers = #tpu.dot_dimension_numbers<[1], [0], [0], [1], [0, 0, 1, 1], [], []>, precision = #tpu.contract_precision<fp32>} : vector<64x128xf32>, vector<128x128xf32>, vector<64x128xf32> -> vector<64x128xf32>
    %c0_3 = arith.constant 0 : index
    %c0_4 = arith.constant 0 : index
    %8 = vector.load %arg3[%c0_3, %c0_4] : memref<64x128xf32, #tpu.memory_space<vmem>>, vector<64x128xf32>
    tpu.vector_store %arg3[%c0_3, %c0_4], %7 {strides = array<i32>} : memref<64x128xf32, #tpu.memory_space<vmem>>, vector<64x128xf32>,
    return
  }
  func.func @transform_0(%arg0: i32) -> (i32, i32) {
    %c0_i32 = arith.constant 0 : i32
    %c0_i32_0 = arith.constant 0 : i32
    return %arg0, %c0_i32 : i32, i32
  }
  func.func @transform_1(%arg0: i32) -> (i32, i32) {
    %c0_i32 = arith.constant 0 : i32
    %c0_i32_0 = arith.constant 0 : i32
    %c0_i32_1 = arith.constant 0 : i32
    return %c0_i32, %c0_i32_0 : i32, i32
  }
  func.func @transform_2(%arg0: i32) -> (i32, i32) {
    %c0_i32 = arith.constant 0 : i32
    %c0_i32_0 = arith.constant 0 : i32
    return %arg0, %c0_i32 : i32, i32
  }
}

</mosaic_0001>

<llo_original>
// kernel: embedding_lookup.1
$region0: #{embedding_lookup.1}
  #allocation0 [shape = 'u32[]', space=smem, size = 0x4, offset = 0x4, fixed_abs, tag = 'smem constant byte address 0x4 - core index']
  #allocation1 [shape = 'u32[144,128]{1,0:T(1,128)}', space=vmem, size = 0x12000, scoped, tag = 'internal scratch']
  %s0 = inlined_call_operand.vmem [shape: s32[128,1], index: 0, kind: input, shape index: {}]
  %s1 = inlined_call_operand.vmem [shape: f32[128,128], index: 1, kind: input, shape index: {}]
  %s2 = inlined_call_operand.hbm [shape: f32[128,128], index: 2, kind: output, shape index: {}]
  %s3 = sld [smem:[#allocation0]]
  $region41: #{embedding_lookup.1} parent=0
    _
  %s5 = ssub.s32 1, %s3
  %s6 = scalar_select 0, %s5, %s3
  $region1: #{embedding_lookup.1} parent=0
    #allocation2 [shape = 'u8[65536]{0}', space=vmem, size = 0x10000, scoped, tag = 'output window, operand 0']
    #allocation3 [shape = 's32[2]{0}', space=sflag, size = 0x8, scoped, tag = 'scoped memory for embedding_lookup.1']
    %7 = vsyncpa [#allocation3], 0
    %s8 = scalar_lea.sflag [#allocation3], 1
    %9 = vsyncpa %s8, 0
    loop: start=0, step=1, limit=4
    $region2: #{embedding_lookup.1} parent=1 // loop_pre_header
      _
    $region3: #{embedding_lookup.1} parent=1 // loop_header
      %s11 = sphi 0, %s15
      %p12 = scmp.ge.s32.totalorder %s11, 4
      %s21 = sphi 0, %s23
      %s24 = sphi 0, %s21
      %s25 = sphi 0, %s24
      %s41 = sphi 0, %s25
      %s45 = sphi 0, %s45
      %s47 = sphi 0, %s45
      %s48 = sphi 0, %s47
      %s62 = sphi 0, %s48
      %s68 = sphi 0, %s70
      %s71 = sphi 0, %s68
      %s72 = sphi 0, %s71
      %s88 = sphi 0, %s72
    $region4: #{embedding_lookup.1} parent=1 // loop_header_branch
      %14 = sbr.rel (%p12) target = $region8
    $region5: #{embedding_lookup.1} parent=1 // loop_body
      %s16 = ssub.s32 %s11, 1
      %s17 = ssub.s32 %s11, 2
      %s18 = sadd.s32 %s11, 1
      %s19 = ssub.s32 %s11, %s18
      %p20 = scmp.eq.s32.totalorder %s19, 0
      %s22 = sadd.s32 %s21, 1
      %s23 = scalar_select %p20, %s21, %s22
      %p26 = pneg %p20
      %p27 = scmp.eq.s32.totalorder %s11, 1
      %p28 = por %p26, %p27
      %p29 = scmp.ne.s32.totalorder %s21, %s24
      %p30 = scmp.eq.s32.totalorder %s11, 0
      %p31 = por %p29, %p30
      %p32 = scmp.ne.s32.totalorder %s21, %s24
      %p33 = scmp.eq.s32.totalorder %s16, 1
      %p34 = por %p32, %p33
      %p35 = scmp.ne.s32.totalorder %s24, %s25
      %p36 = scmp.eq.s32.totalorder %s16, 0
      %p37 = por %p35, %p36
      %p38 = scmp.ne.s32.totalorder %s24, %s25
      %p39 = scmp.eq.s32.totalorder %s17, 1
      %p40 = por %p38, %p39
      %p42 = scmp.ne.s32.totalorder %s25, %s41
      %p43 = scmp.eq.s32.totalorder %s17, 0
      %p44 = por %p42, %p43
      %s46 = sadd.s32 %s45, 1
      %p49 = scmp.eq.s32.totalorder %s11, 1
      %p50 = scmp.ne.s32.totalorder %s45, %s47
      %p51 = scmp.eq.s32.totalorder %s11, 0
      %p52 = por %p50, %p51
      %p53 = scmp.ne.s32.totalorder %s45, %s47
      %p54 = scmp.eq.s32.totalorder %s16, 1
      %p55 = por %p53, %p54
      %p56 = scmp.ne.s32.totalorder %s47, %s48
      %p57 = scmp.eq.s32.totalorder %s16, 0
      %p58 = por %p56, %p57
      %p59 = scmp.ne.s32.totalorder %s47, %s48
      %p60 = scmp.eq.s32.totalorder %s17, 1
      %p61 = por %p59, %p60
      %p63 = scmp.ne.s32.totalorder %s48, %s62
      %p64 = scmp.eq.s32.totalorder %s17, 0
      %p65 = por %p63, %p64
      %s66 = ssub.s32 %s11, %s18
      %p67 = scmp.eq.s32.totalorder %s66, 0
      %s69 = sadd.s32 %s68, 1
      %s70 = scalar_select %p67, %s68, %s69
      %p73 = pneg %p67
      %p74 = scmp.eq.s32.totalorder %s11, 1
      %p75 = por %p73, %p74
      %p76 = scmp.ne.s32.totalorder %s68, %s71
      %p77 = scmp.eq.s32.totalorder %s11, 0
      %p78 = por %p76, %p77
      %p79 = scmp.ne.s32.totalorder %s68, %s71
      %p80 = scmp.eq.s32.totalorder %s16, 1
      %p81 = por %p79, %p80
      %p82 = scmp.ne.s32.totalorder %s71, %s72
      %p83 = scmp.eq.s32.totalorder %s16, 0
      %p84 = por %p82, %p83
      %p85 = scmp.ne.s32.totalorder %s71, %s72
      %p86 = scmp.eq.s32.totalorder %s17, 1
      %p87 = por %p85, %p86
      %p89 = scmp.ne.s32.totalorder %s72, %s88
      %p90 = scmp.eq.s32.totalorder %s17, 0
      %p91 = por %p89, %p90
      %p92 = scmp.le.s32.totalorder 1, %s11
      %p93 = scmp.lt.s32.totalorder %s11, 3
      %p94 = pnand %p92, %p93
      %p95 = pneg %p94
      // Predicated region
      $region9: #{embedding_lookup.1} parent=5 // pred_check
        _
      $region10: #{embedding_lookup.1} parent=5 // pred_check_branch
        %97 = sbr.rel (%p94) target = $region12
      $region11: #{embedding_lookup.1} parent=5 // pred_region
        %s98 = ssub.s32 %s11, 1
        // Predicated region
        $region13: #{embedding_lookup.1} parent=11 // pred_check
          %p99 = pneg %p58
        $region14: #{embedding_lookup.1} parent=11 // pred_check_branch
          %101 = sbr.rel (%p99) target = $region16
        $region15: #{embedding_lookup.1} parent=11 // pred_region
          _
        $region16: #{embedding_lookup.1} parent=11 // pred_fallthru
          _
      $region12: #{embedding_lookup.1} parent=5 // pred_fallthru
        _
      %p102 = scmp.lt.s32.totalorder %s11, 2
      // Predicated region
      $region17: #{embedding_lookup.1} parent=5 // pred_check
        %p103 = pneg %p102
      $region18: #{embedding_lookup.1} parent=5 // pred_check_branch
        %105 = sbr.rel (%p103) target = $region20
      $region19: #{embedding_lookup.1} parent=5 // pred_region
        // Predicated region
        $region21: #{embedding_lookup.1} parent=19 // pred_check
          %p106 = pneg %p31
        $region22: #{embedding_lookup.1} parent=19 // pred_check_branch
          %108 = sbr.rel (%p106) target = $region24
        $region23: #{embedding_lookup.1} parent=19 // pred_region
          %s109 = smul.u32 8, %s11
          %p110 = scmp.lt.s32.totalorder %s109, 15
          %s111 = scalar_select %p110, %s109, 15
          %s112 = smul.addr %s111, 8
          %s113 = scalar_lea.vmem %s0, %s112
          %s114 = smul.u32 8, %s11
        $region24: #{embedding_lookup.1} parent=19 // pred_fallthru
          _
      $region20: #{embedding_lookup.1} parent=5 // pred_fallthru
        _
      %p115 = scmp.le.s32.totalorder 1, %s11
      %p116 = scmp.lt.s32.totalorder %s11, 3
      %p117 = pnand %p115, %p116
      %p118 = pneg %p117
      // Predicated region
      $region25: #{embedding_lookup.1} parent=5 // pred_check
        _
      $region26: #{embedding_lookup.1} parent=5 // pred_check_branch
        %120 = sbr.rel (%p117) target = $region28
      $region27: #{embedding_lookup.1} parent=5 // pred_region
        %s121 = ssub.s32 %s11, 1
        %s122 = smul.u32 8, %s16
        %p123 = scmp.lt.s32.totalorder %s122, 15
        %s124 = scalar_select %p123, %s122, 15
        %s125 = smul.addr %s124, 8
        %s126 = scalar_lea.vmem %s0, %s125
        %p127 = pneg %p37
        %p128 = pneg %p34
        %p129 = pneg %p58
        %p130 = pneg %p55
        %p131 = pneg %p84
        %p132 = pneg %p81
        %s133 = sand.u32 %s71, 1
        %s134 = scalar_lea.sflag [#allocation3], %s133
        %s135 = sand.u32 %s71, 1
        %s136 = smul.addr %s135, 64
        %s137 = scalar_lea.vmem [#allocation2], %s136
        %s138 = smul.u32 8, %s16
        %p139 = scmp.lt.s32.totalorder %s138, 15
        %s140 = scalar_select %p139, %s138, 15
        %s141 = smul.addr %s140, 8
        %s142 = scalar_lea.vmem %s0, %s141
        %s143 = smul.u32 8, %s16
        %s144 = smul.u32 8, %s16
        %v145 = vld [vmem:[%s142] sm:$0xff]
        %v146 = vld [vmem:[%s142 + $0x8] sm:$0xff]
        %v147 = vld [vmem:[%s142 + $0x10] sm:$0xff]
        %v148 = vld [vmem:[%s142 + $0x18] sm:$0xff]
        %v149 = vld [vmem:[%s142 + $0x20] sm:$0xff]
        %v150 = vld [vmem:[%s142 + $0x28] sm:$0xff]
        %v151 = vld [vmem:[%s142 + $0x30] sm:$0xff]
        %v152 = vld [vmem:[%s142 + $0x38] sm:$0xff]
        %v153 = vlaneseq
        %v154 = vand.u32 %v153, 127
        %155 = vset.pattern.permute.xlu0 0
        %156 = vperm.xlu0 %155, %v145
        %v157 = vpop.permute.xlu0 %156
        %158 = vset.pattern.permute.xlu0 0
        %159 = vperm.xlu0 %158, %v146
        %v160 = vpop.permute.xlu0 %159
        %161 = vset.pattern.permute.xlu0 0
        %162 = vperm.xlu0 %161, %v147
        %v163 = vpop.permute.xlu0 %162
        %164 = vset.pattern.permute.xlu0 0
        %165 = vperm.xlu0 %164, %v148
        %v166 = vpop.permute.xlu0 %165
        %167 = vset.pattern.permute.xlu0 0
        %168 = vperm.xlu0 %167, %v149
        %v169 = vpop.permute.xlu0 %168
        %170 = vset.pattern.permute.xlu0 0
        %171 = vperm.xlu0 %170, %v150
        %v172 = vpop.permute.xlu0 %171
        %173 = vset.pattern.permute.xlu0 0
        %174 = vperm.xlu0 %173, %v151
        %v175 = vpop.permute.xlu0 %174
        %176 = vset.pattern.permute.xlu0 0
        %177 = vperm.xlu0 %176, %v152
        %v178 = vpop.permute.xlu0 %177
        %vm179 = vcmp.eq.s32.totalorder %v157, %v154
        %vm180 = vcmp.eq.s32.totalorder %v160, %v154
        %vm181 = vcmp.eq.s32.totalorder %v163, %v154
        %vm182 = vcmp.eq.s32.totalorder %v166, %v154
        %vm183 = vcmp.eq.s32.totalorder %v169, %v154
        %vm184 = vcmp.eq.s32.totalorder %v172, %v154
        %vm185 = vcmp.eq.s32.totalorder %v175, %v154
        %vm186 = vcmp.eq.s32.totalorder %v178, %v154
        %v187 = vsel %vm179, 1, 0
        %v188 = vsel %vm180, 1, 0
        %v189 = vsel %vm181, 1, 0
        %v190 = vsel %vm182, 1, 0
        %v191 = vsel %vm183, 1, 0
        %v192 = vsel %vm184, 1, 0
        %v193 = vsel %vm185, 1, 0
        %v194 = vsel %vm186, 1, 0
        %v195 = vcvt.s32.f32 %v187
        %v196 = vcvt.s32.f32 %v188
        %v197 = vcvt.s32.f32 %v189
        %v198 = vcvt.s32.f32 %v190
        %v199 = vcvt.s32.f32 %v191
        %v200 = vcvt.s32.f32 %v192
        %v201 = vcvt.s32.f32 %v193
        %v202 = vcvt.s32.f32 %v194
        %v203 = vld [vmem:[%s1] sm:$0xff]
        %v204 = vld [vmem:[%s1 + $0x8] sm:$0xff]
        %v205 = vld [vmem:[%s1 + $0x10] sm:$0xff]
        %v206 = vld [vmem:[%s1 + $0x18] sm:$0xff]
        %v207 = vld [vmem:[%s1 + $0x20] sm:$0xff]
        %v208 = vld [vmem:[%s1 + $0x28] sm:$0xff]
        %v209 = vld [vmem:[%s1 + $0x30] sm:$0xff]
        %v210 = vld [vmem:[%s1 + $0x38] sm:$0xff]
        %v211 = vld [vmem:[%s1 + $0x40] sm:$0xff]
        %v212 = vld [vmem:[%s1 + $0x48] sm:$0xff]
        %v213 = vld [vmem:[%s1 + $0x50] sm:$0xff]
        %v214 = vld [vmem:[%s1 + $0x58] sm:$0xff]
        %v215 = vld [vmem:[%s1 + $0x60] sm:$0xff]
        %v216 = vld [vmem:[%s1 + $0x68] sm:$0xff]
        %v217 = vld [vmem:[%s1 + $0x70] sm:$0xff]
        %v218 = vld [vmem:[%s1 + $0x78] sm:$0xff]
        %219 = vmatprep.subr.mxu0 0.0
        %v220 = vand.u32 %v218, 4294901760
        %221 = vmatpush1.msra.mxu0 %v220
        %222 = vmatprep.subr.mxu0 0.0
        %v223 = vand.u32 %v217, 4294901760
        %224 = vmatpush1.msra.mxu0 %v223
        %225 = vmatprep.subr.mxu0 0.0
        %v226 = vand.u32 %v216, 4294901760
        %227 = vmatpush1.msra.mxu0 %v226
        %228 = vmatprep.subr.mxu0 0.0
        %v229 = vand.u32 %v215, 4294901760
        %230 = vmatpush1.msra.mxu0 %v229
        %231 = vmatprep.subr.mxu0 0.0
        %v232 = vand.u32 %v214, 4294901760
        %233 = vmatpush1.msra.mxu0 %v232
        %234 = vmatprep.subr.mxu0 0.0
        %v235 = vand.u32 %v213, 4294901760
        %236 = vmatpush1.msra.mxu0 %v235
        %237 = vmatprep.subr.mxu0 0.0
        %v238 = vand.u32 %v212, 4294901760
        %239 = vmatpush1.msra.mxu0 %v238
        %240 = vmatprep.subr.mxu0 0.0
        %v241 = vand.u32 %v211, 4294901760
        %242 = vmatpush1.msra.mxu0 %v241
        %243 = vmatprep.subr.mxu0 0.0
        %v244 = vand.u32 %v210, 4294901760
        %245 = vmatpush1.msra.mxu0 %v244
        %246 = vmatprep.subr.mxu0 0.0
        %v247 = vand.u32 %v209, 4294901760
        %248 = vmatpush1.msra.mxu0 %v247
        %249 = vmatprep.subr.mxu0 0.0
        %v250 = vand.u32 %v208, 4294901760
        %251 = vmatpush1.msra.mxu0 %v250
        %252 = vmatprep.subr.mxu0 0.0
        %v253 = vand.u32 %v207, 4294901760
        %254 = vmatpush1.msra.mxu0 %v253
        %255 = vmatprep.subr.mxu0 0.0
        %v256 = vand.u32 %v206, 4294901760
        %257 = vmatpush1.msra.mxu0 %v256
        %258 = vmatprep.subr.mxu0 0.0
        %v259 = vand.u32 %v205, 4294901760
        %260 = vmatpush1.msra.mxu0 %v259
        %261 = vmatprep.subr.mxu0 0.0
        %v262 = vand.u32 %v204, 4294901760
        %263 = vmatpush1.msra.mxu0 %v262
        %264 = vmatprep.subr.mxu0 0.0
        %v265 = vand.u32 %v203, 4294901760
        %266 = vmatpush1.msra.mxu0 %v265
        %267 = vmatprep.subr.mxu0 0.0
        %268 = vmatpush2.msra.mxu0 0.0
        %269 = vmatprep.subr.mxu0 0.0
        %270 = vmatpush2.msra.mxu0 0.0
        %271 = vmatprep.subr.mxu0 0.0
        %272 = vmatpush2.msra.mxu0 0.0
        %273 = vmatprep.subr.mxu0 0.0
        %274 = vmatpush2.msra.mxu0 0.0
        %275 = vmatprep.subr.mxu0 0.0
        %276 = vmatpush2.msra.mxu0 0.0
        %277 = vmatprep.subr.mxu0 0.0
        %278 = vmatpush2.msra.mxu0 0.0
        %279 = vmatprep.subr.mxu0 0.0
        %280 = vmatpush2.msra.mxu0 0.0
        %281 = vmatprep.subr.mxu0 0.0
        %282 = vmatpush2.msra.mxu0 0.0
        %283 = vmatprep.subr.mxu0 0.0
        %284 = vmatpush2.msra.mxu0 0.0
        %285 = vmatprep.subr.mxu0 0.0
        %286 = vmatpush2.msra.mxu0 0.0
        %287 = vmatprep.subr.mxu0 0.0
        %288 = vmatpush2.msra.mxu0 0.0
        %289 = vmatprep.subr.mxu0 0.0
        %290 = vmatpush2.msra.mxu0 0.0
        %291 = vmatprep.subr.mxu0 0.0
        %292 = vmatpush2.msra.mxu0 0.0
        %293 = vmatprep.subr.mxu0 0.0
        %294 = vmatpush2.msra.mxu0 0.0
        %295 = vmatprep.subr.mxu0 0.0
        %296 = vmatpush2.msra.mxu0 0.0
        %297 = vmatprep.subr.mxu0 0.0
        %298 = vmatpush2.msra.mxu0 0.0
        %299 = vmatprep.mubr.f32.mxu0 0.0
        %v300 = vand.u32 %v195, 4294901760
        %v301 = vsub.f32 %v195, %v300
        %v302 = vand.u32 %v301, 4294901760
        %v303 = vsub.f32 %v301, %v302
        %v304 = vand.u32 %v303, 4294901760
        %305 = vmatmul.mubr.f32.gmra.mxu0 %v304
        %v306 = vpop.f32.mrf.mxu0
        %v307 = vadd.f32 0.0, %v306
        %v308 = vpop.f32.mrf.mxu0
        %309 = vmatprep.mubr.f32.mxu0 0.0
        %v310 = vand.u32 %v196, 4294901760
        %v311 = vsub.f32 %v196, %v310
        %v312 = vand.u32 %v311, 4294901760
        %v313 = vsub.f32 %v311, %v312
        %v314 = vand.u32 %v313, 4294901760
        %315 = vmatmul.mubr.f32.gmra.mxu0 %v314
        %v316 = vpop.f32.mrf.mxu0
        %v317 = vadd.f32 0.0, %v316
        %v318 = vpop.f32.mrf.mxu0
        %319 = vmatprep.mubr.f32.mxu0 0.0
        %v320 = vand.u32 %v197, 4294901760
        %v321 = vsub.f32 %v197, %v320
        %v322 = vand.u32 %v321, 4294901760
        %v323 = vsub.f32 %v321, %v322
        %v324 = vand.u32 %v323, 4294901760
        %325 = vmatmul.mubr.f32.gmra.mxu0 %v324
        %v326 = vpop.f32.mrf.mxu0
        %v327 = vadd.f32 0.0, %v326
        %v328 = vpop.f32.mrf.mxu0
        %329 = vmatprep.mubr.f32.mxu0 0.0
        %v330 = vand.u32 %v198, 4294901760
        %v331 = vsub.f32 %v198, %v330
        %v332 = vand.u32 %v331, 4294901760
        %v333 = vsub.f32 %v331, %v332
        %v334 = vand.u32 %v333, 4294901760
        %335 = vmatmul.mubr.f32.gmra.mxu0 %v334
        %v336 = vpop.f32.mrf.mxu0
        %v337 = vadd.f32 0.0, %v336
        %v338 = vpop.f32.mrf.mxu0
        %339 = vmatprep.mubr.f32.mxu0 0.0
        %v340 = vand.u32 %v199, 4294901760
        %v341 = vsub.f32 %v199, %v340
        %v342 = vand.u32 %v341, 4294901760
        %v343 = vsub.f32 %v341, %v342
        %v344 = vand.u32 %v343, 4294901760
        %345 = vmatmul.mubr.f32.gmra.mxu0 %v344
        %v346 = vpop.f32.mrf.mxu0
        %v347 = vadd.f32 0.0, %v346
        %v348 = vpop.f32.mrf.mxu0
        %349 = vmatprep.mubr.f32.mxu0 0.0
        %v350 = vand.u32 %v200, 4294901760
        %v351 = vsub.f32 %v200, %v350
        %v352 = vand.u32 %v351, 4294901760
        %v353 = vsub.f32 %v351, %v352
        %v354 = vand.u32 %v353, 4294901760
        %355 = vmatmul.mubr.f32.gmra.mxu0 %v354
        %v356 = vpop.f32.mrf.mxu0
        %v357 = vadd.f32 0.0, %v356
        %v358 = vpop.f32.mrf.mxu0
        %359 = vmatprep.mubr.f32.mxu0 0.0
        %v360 = vand.u32 %v201, 4294901760
        %v361 = vsub.f32 %v201, %v360
        %v362 = vand.u32 %v361, 4294901760
        %v363 = vsub.f32 %v361, %v362
        %v364 = vand.u32 %v363, 4294901760
        %365 = vmatmul.mubr.f32.gmra.mxu0 %v364
        %v366 = vpop.f32.mrf.mxu0
        %v367 = vadd.f32 0.0, %v366
        %v368 = vpop.f32.mrf.mxu0
        %369 = vmatprep.mubr.f32.mxu0 0.0
        %v370 = vand.u32 %v202, 4294901760
        %v371 = vsub.f32 %v202, %v370
        %v372 = vand.u32 %v371, 4294901760
        %v373 = vsub.f32 %v371, %v372
        %v374 = vand.u32 %v373, 4294901760
        %375 = vmatmul.mubr.f32.gmra.mxu0 %v374
        %v376 = vpop.f32.mrf.mxu0
        %v377 = vadd.f32 0.0, %v376
        %v378 = vpop.f32.mrf.mxu0
        %379 = vdwg.mxu0
        %380 = vmatprep.subr.mxu0 0.0
        %v381 = vand.u32 %v218, 4294901760
        %v382 = vsub.f32 %v218, %v381
        %v383 = vand.u32 %v382, 4294901760
        %v384 = vsub.f32 %v382, %v383
        %v385 = vand.u32 %v384, 4294901760
        %386 = vmatpush1.msra.mxu0 %v385
        %387 = vmatprep.subr.mxu0 0.0
        %v388 = vand.u32 %v217, 4294901760
        %v389 = vsub.f32 %v217, %v388
        %v390 = vand.u32 %v389, 4294901760
        %v391 = vsub.f32 %v389, %v390
        %v392 = vand.u32 %v391, 4294901760
        %393 = vmatpush1.msra.mxu0 %v392
        %394 = vmatprep.subr.mxu0 0.0
        %v395 = vand.u32 %v216, 4294901760
        %v396 = vsub.f32 %v216, %v395
        %v397 = vand.u32 %v396, 4294901760
        %v398 = vsub.f32 %v396, %v397
        %v399 = vand.u32 %v398, 4294901760
        %400 = vmatpush1.msra.mxu0 %v399
        %401 = vmatprep.subr.mxu0 0.0
        %v402 = vand.u32 %v215, 4294901760
        %v403 = vsub.f32 %v215, %v402
        %v404 = vand.u32 %v403, 4294901760
        %v405 = vsub.f32 %v403, %v404
        %v406 = vand.u32 %v405, 4294901760
        %407 = vmatpush1.msra.mxu0 %v406
        %408 = vmatprep.subr.mxu0 0.0
        %v409 = vand.u32 %v214, 4294901760
        %v410 = vsub.f32 %v214, %v409
        %v411 = vand.u32 %v410, 4294901760
        %v412 = vsub.f32 %v410, %v411
        %v413 = vand.u32 %v412, 4294901760
        %414 = vmatpush1.msra.mxu0 %v413
        %415 = vmatprep.subr.mxu0 0.0
        %v416 = vand.u32 %v213, 4294901760
        %v417 = vsub.f32 %v213, %v416
        %v418 = vand.u32 %v417, 4294901760
        %v419 = vsub.f32 %v417, %v418
        %v420 = vand.u32 %v419, 4294901760
        %421 = vmatpush1.msra.mxu0 %v420
        %422 = vmatprep.subr.mxu0 0.0
        %v423 = vand.u32 %v212, 4294901760
        %v424 = vsub.f32 %v212, %v423
        %v425 = vand.u32 %v424, 4294901760
        %v426 = vsub.f32 %v424, %v425
        %v427 = vand.u32 %v426, 4294901760
        %428 = vmatpush1.msra.mxu0 %v427
        %429 = vmatprep.subr.mxu0 0.0
        %v430 = vand.u32 %v211, 4294901760
        %v431 = vsub.f32 %v211, %v430
        %v432 = vand.u32 %v431, 4294901760
        %v433 = vsub.f32 %v431, %v432
        %v434 = vand.u32 %v433, 4294901760
        %435 = vmatpush1.msra.mxu0 %v434
        %436 = vmatprep.subr.mxu0 0.0
        %v437 = vand.u32 %v210, 4294901760
        %v438 = vsub.f32 %v210, %v437
        %v439 = vand.u32 %v438, 4294901760
        %v440 = vsub.f32 %v438, %v439
        %v441 = vand.u32 %v440, 4294901760
        %442 = vmatpush1.msra.mxu0 %v441
        %443 = vmatprep.subr.mxu0 0.0
        %v444 = vand.u32 %v209, 4294901760
        %v445 = vsub.f32 %v209, %v444
        %v446 = vand.u32 %v445, 4294901760
        %v447 = vsub.f32 %v445, %v446
        %v448 = vand.u32 %v447, 4294901760
        %449 = vmatpush1.msra.mxu0 %v448
        %450 = vmatprep.subr.mxu0 0.0
        %v451 = vand.u32 %v208, 4294901760
        %v452 = vsub.f32 %v208, %v451
        %v453 = vand.u32 %v452, 4294901760
        %v454 = vsub.f32 %v452, %v453
        %v455 = vand.u32 %v454, 4294901760
        %456 = vmatpush1.msra.mxu0 %v455
        %457 = vmatprep.subr.mxu0 0.0
        %v458 = vand.u32 %v207, 4294901760
        %v459 = vsub.f32 %v207, %v458
        %v460 = vand.u32 %v459, 4294901760
        %v461 = vsub.f32 %v459, %v460
        %v462 = vand.u32 %v461, 4294901760
        %463 = vmatpush1.msra.mxu0 %v462
        %464 = vmatprep.subr.mxu0 0.0
        %v465 = vand.u32 %v206, 4294901760
        %v466 = vsub.f32 %v206, %v465
        %v467 = vand.u32 %v466, 4294901760
        %v468 = vsub.f32 %v466, %v467
        %v469 = vand.u32 %v468, 4294901760
        %470 = vmatpush1.msra.mxu0 %v469
        %471 = vmatprep.subr.mxu0 0.0
        %v472 = vand.u32 %v205, 4294901760
        %v473 = vsub.f32 %v205, %v472
        %v474 = vand.u32 %v473, 4294901760
        %v475 = vsub.f32 %v473, %v474
        %v476 = vand.u32 %v475, 4294901760
        %477 = vmatpush1.msra.mxu0 %v476
        %478 = vmatprep.subr.mxu0 0.0
        %v479 = vand.u32 %v204, 4294901760
        %v480 = vsub.f32 %v204, %v479
        %v481 = vand.u32 %v480, 4294901760
        %v482 = vsub.f32 %v480, %v481
        %v483 = vand.u32 %v482, 4294901760
        %484 = vmatpush1.msra.mxu0 %v483
        %485 = vmatprep.subr.mxu0 0.0
        %v486 = vand.u32 %v203, 4294901760
        %v487 = vsub.f32 %v203, %v486
        %v488 = vand.u32 %v487, 4294901760
        %v489 = vsub.f32 %v487, %v488
        %v490 = vand.u32 %v489, 4294901760
        %491 = vmatpush1.msra.mxu0 %v490
        %492 = vmatprep.subr.mxu0 0.0
        %493 = vmatpush2.msra.mxu0 0.0
        %494 = vmatprep.subr.mxu0 0.0
        %495 = vmatpush2.msra.mxu0 0.0
        %496 = vmatprep.subr.mxu0 0.0
        %497 = vmatpush2.msra.mxu0 0.0
        %498 = vmatprep.subr.mxu0 0.0
        %499 = vmatpush2.msra.mxu0 0.0
        %500 = vmatprep.subr.mxu0 0.0
        %501 = vmatpush2.msra.mxu0 0.0
        %502 = vmatprep.subr.mxu0 0.0
        %503 = vmatpush2.msra.mxu0 0.0
        %504 = vmatprep.subr.mxu0 0.0
        %505 = vmatpush2.msra.mxu0 0.0
        %506 = vmatprep.subr.mxu0 0.0
        %507 = vmatpush2.msra.mxu0 0.0
        %508 = vmatprep.subr.mxu0 0.0
        %509 = vmatpush2.msra.mxu0 0.0
        %510 = vmatprep.subr.mxu0 0.0
        %511 = vmatpush2.msra.mxu0 0.0
        %512 = vmatprep.subr.mxu0 0.0
        %513 = vmatpush2.msra.mxu0 0.0
        %514 = vmatprep.subr.mxu0 0.0
        %515 = vmatpush2.msra.mxu0 0.0
        %516 = vmatprep.subr.mxu0 0.0
        %517 = vmatpush2.msra.mxu0 0.0
        %518 = vmatprep.subr.mxu0 0.0
        %519 = vmatpush2.msra.mxu0 0.0
        %520 = vmatprep.subr.mxu0 0.0
        %521 = vmatpush2.msra.mxu0 0.0
        %522 = vmatprep.subr.mxu0 0.0
        %523 = vmatpush2.msra.mxu0 0.0
        %524 = vmatprep.mubr.f32.mxu0 0.0
        %v525 = vand.u32 %v195, 4294901760
        %526 = vmatmul.mubr.f32.gmra.mxu0 %v525
        %v527 = vpop.f32.mrf.mxu0
        %v528 = vadd.f32 %v307, %v527
        %v529 = vpop.f32.mrf.mxu0
        %530 = vmatprep.mubr.f32.mxu0 0.0
        %v531 = vand.u32 %v196, 4294901760
        %532 = vmatmul.mubr.f32.gmra.mxu0 %v531
        %v533 = vpop.f32.mrf.mxu0
        %v534 = vadd.f32 %v317, %v533
        %v535 = vpop.f32.mrf.mxu0
        %536 = vmatprep.mubr.f32.mxu0 0.0
        %v537 = vand.u32 %v197, 4294901760
        %538 = vmatmul.mubr.f32.gmra.mxu0 %v537
        %v539 = vpop.f32.mrf.mxu0
        %v540 = vadd.f32 %v327, %v539
        %v541 = vpop.f32.mrf.mxu0
        %542 = vmatprep.mubr.f32.mxu0 0.0
        %v543 = vand.u32 %v198, 4294901760
        %544 = vmatmul.mubr.f32.gmra.mxu0 %v543
        %v545 = vpop.f32.mrf.mxu0
        %v546 = vadd.f32 %v337, %v545
        %v547 = vpop.f32.mrf.mxu0
        %548 = vmatprep.mubr.f32.mxu0 0.0
        %v549 = vand.u32 %v199, 4294901760
        %550 = vmatmul.mubr.f32.gmra.mxu0 %v549
        %v551 = vpop.f32.mrf.mxu0
        %v552 = vadd.f32 %v347, %v551
        %v553 = vpop.f32.mrf.mxu0
        %554 = vmatprep.mubr.f32.mxu0 0.0
        %v555 = vand.u32 %v200, 4294901760
        %556 = vmatmul.mubr.f32.gmra.mxu0 %v555
        %v557 = vpop.f32.mrf.mxu0
        %v558 = vadd.f32 %v357, %v557
        %v559 = vpop.f32.mrf.mxu0
        %560 = vmatprep.mubr.f32.mxu0 0.0
        %v561 = vand.u32 %v201, 4294901760
        %562 = vmatmul.mubr.f32.gmra.mxu0 %v561
        %v563 = vpop.f32.mrf.mxu0
        %v564 = vadd.f32 %v367, %v563
        %v565 = vpop.f32.mrf.mxu0
        %566 = vmatprep.mubr.f32.mxu0 0.0
        %v567 = vand.u32 %v202, 4294901760
        %568 = vmatmul.mubr.f32.gmra.mxu0 %v567
        %v569 = vpop.f32.mrf.mxu0
        %v570 = vadd.f32 %v377, %v569
        %v571 = vpop.f32.mrf.mxu0
        %572 = vdwg.mxu0
        %573 = vmatprep.subr.mxu0 0.0
        %v574 = vand.u32 %v218, 4294901760
        %v575 = vsub.f32 %v218, %v574
        %576 = vmatpush1.msra.mxu0 %v575
        %577 = vmatprep.subr.mxu0 0.0
        %v578 = vand.u32 %v217, 4294901760
        %v579 = vsub.f32 %v217, %v578
        %580 = vmatpush1.msra.mxu0 %v579
        %581 = vmatprep.subr.mxu0 0.0
        %v582 = vand.u32 %v216, 4294901760
        %v583 = vsub.f32 %v216, %v582
        %584 = vmatpush1.msra.mxu0 %v583
        %585 = vmatprep.subr.mxu0 0.0
        %v586 = vand.u32 %v215, 4294901760
        %v587 = vsub.f32 %v215, %v586
        %588 = vmatpush1.msra.mxu0 %v587
        %589 = vmatprep.subr.mxu0 0.0
        %v590 = vand.u32 %v214, 4294901760
        %v591 = vsub.f32 %v214, %v590
        %592 = vmatpush1.msra.mxu0 %v591
        %593 = vmatprep.subr.mxu0 0.0
        %v594 = vand.u32 %v213, 4294901760
        %v595 = vsub.f32 %v213, %v594
        %596 = vmatpush1.msra.mxu0 %v595
        %597 = vmatprep.subr.mxu0 0.0
        %v598 = vand.u32 %v212, 4294901760
        %v599 = vsub.f32 %v212, %v598
        %600 = vmatpush1.msra.mxu0 %v599
        %601 = vmatprep.subr.mxu0 0.0
        %v602 = vand.u32 %v211, 4294901760
        %v603 = vsub.f32 %v211, %v602
        %604 = vmatpush1.msra.mxu0 %v603
        %605 = vmatprep.subr.mxu0 0.0
        %v606 = vand.u32 %v210, 4294901760
        %v607 = vsub.f32 %v210, %v606
        %608 = vmatpush1.msra.mxu0 %v607
        %609 = vmatprep.subr.mxu0 0.0
        %v610 = vand.u32 %v209, 4294901760
        %v611 = vsub.f32 %v209, %v610
        %612 = vmatpush1.msra.mxu0 %v611
        %613 = vmatprep.subr.mxu0 0.0
        %v614 = vand.u32 %v208, 4294901760
        %v615 = vsub.f32 %v208, %v614
        %616 = vmatpush1.msra.mxu0 %v615
        %617 = vmatprep.subr.mxu0 0.0
        %v618 = vand.u32 %v207, 4294901760
        %v619 = vsub.f32 %v207, %v618
        %620 = vmatpush1.msra.mxu0 %v619
        %621 = vmatprep.subr.mxu0 0.0
        %v622 = vand.u32 %v206, 4294901760
        %v623 = vsub.f32 %v206, %v622
        %624 = vmatpush1.msra.mxu0 %v623
        %625 = vmatprep.subr.mxu0 0.0
        %v626 = vand.u32 %v205, 4294901760
        %v627 = vsub.f32 %v205, %v626
        %628 = vmatpush1.msra.mxu0 %v627
        %629 = vmatprep.subr.mxu0 0.0
        %v630 = vand.u32 %v204, 4294901760
        %v631 = vsub.f32 %v204, %v630
        %632 = vmatpush1.msra.mxu0 %v631
        %633 = vmatprep.subr.mxu0 0.0
        %v634 = vand.u32 %v203, 4294901760
        %v635 = vsub.f32 %v203, %v634
        %636 = vmatpush1.msra.mxu0 %v635
        %637 = vmatprep.subr.mxu0 0.0
        %638 = vmatpush2.msra.mxu0 0.0
        %639 = vmatprep.subr.mxu0 0.0
        %640 = vmatpush2.msra.mxu0 0.0
        %641 = vmatprep.subr.mxu0 0.0
        %642 = vmatpush2.msra.mxu0 0.0
        %643 = vmatprep.subr.mxu0 0.0
        %644 = vmatpush2.msra.mxu0 0.0
        %645 = vmatprep.subr.mxu0 0.0
        %646 = vmatpush2.msra.mxu0 0.0
        %647 = vmatprep.subr.mxu0 0.0
        %648 = vmatpush2.msra.mxu0 0.0
        %649 = vmatprep.subr.mxu0 0.0
        %650 = vmatpush2.msra.mxu0 0.0
        %651 = vmatprep.subr.mxu0 0.0
        %652 = vmatpush2.msra.mxu0 0.0
        %653 = vmatprep.subr.mxu0 0.0
        %654 = vmatpush2.msra.mxu0 0.0
        %655 = vmatprep.subr.mxu0 0.0
        %656 = vmatpush2.msra.mxu0 0.0
        %657 = vmatprep.subr.mxu0 0.0
        %658 = vmatpush2.msra.mxu0 0.0
        %659 = vmatprep.subr.mxu0 0.0
        %660 = vmatpush2.msra.mxu0 0.0
        %661 = vmatprep.subr.mxu0 0.0
        %662 = vmatpush2.msra.mxu0 0.0
        %663 = vmatprep.subr.mxu0 0.0
        %664 = vmatpush2.msra.mxu0 0.0
        %665 = vmatprep.subr.mxu0 0.0
        %666 = vmatpush2.msra.mxu0 0.0
        %667 = vmatprep.subr.mxu0 0.0
        %668 = vmatpush2.msra.mxu0 0.0
        %669 = vmatprep.mubr.f32.mxu0 0.0
        %v670 = vand.u32 %v195, 4294901760
        %v671 = vsub.f32 %v195, %v670
        %672 = vmatmul.mubr.f32.gmra.mxu0 %v671
        %v673 = vpop.f32.mrf.mxu0
        %v674 = vadd.f32 %v528, %v673
        %v675 = vpop.f32.mrf.mxu0
        %676 = vmatprep.mubr.f32.mxu0 0.0
        %v677 = vand.u32 %v196, 4294901760
        %v678 = vsub.f32 %v196, %v677
        %679 = vmatmul.mubr.f32.gmra.mxu0 %v678
        %v680 = vpop.f32.mrf.mxu0
        %v681 = vadd.f32 %v534, %v680
        %v682 = vpop.f32.mrf.mxu0
        %683 = vmatprep.mubr.f32.mxu0 0.0
        %v684 = vand.u32 %v197, 4294901760
        %v685 = vsub.f32 %v197, %v684
        %686 = vmatmul.mubr.f32.gmra.mxu0 %v685
        %v687 = vpop.f32.mrf.mxu0
        %v688 = vadd.f32 %v540, %v687
        %v689 = vpop.f32.mrf.mxu0
        %690 = vmatprep.mubr.f32.mxu0 0.0
        %v691 = vand.u32 %v198, 4294901760
        %v692 = vsub.f32 %v198, %v691
        %693 = vmatmul.mubr.f32.gmra.mxu0 %v692
        %v694 = vpop.f32.mrf.mxu0
        %v695 = vadd.f32 %v546, %v694
        %v696 = vpop.f32.mrf.mxu0
        %697 = vmatprep.mubr.f32.mxu0 0.0
        %v698 = vand.u32 %v199, 4294901760
        %v699 = vsub.f32 %v199, %v698
        %700 = vmatmul.mubr.f32.gmra.mxu0 %v699
        %v701 = vpop.f32.mrf.mxu0
        %v702 = vadd.f32 %v552, %v701
        %v703 = vpop.f32.mrf.mxu0
        %704 = vmatprep.mubr.f32.mxu0 0.0
        %v705 = vand.u32 %v200, 4294901760
        %v706 = vsub.f32 %v200, %v705
        %707 = vmatmul.mubr.f32.gmra.mxu0 %v706
        %v708 = vpop.f32.mrf.mxu0
        %v709 = vadd.f32 %v558, %v708
        %v710 = vpop.f32.mrf.mxu0
        %711 = vmatprep.mubr.f32.mxu0 0.0
        %v712 = vand.u32 %v201, 4294901760
        %v713 = vsub.f32 %v201, %v712
        %714 = vmatmul.mubr.f32.gmra.mxu0 %v713
        %v715 = vpop.f32.mrf.mxu0
        %v716 = vadd.f32 %v564, %v715
        %v717 = vpop.f32.mrf.mxu0
        %718 = vmatprep.mubr.f32.mxu0 0.0
        %v719 = vand.u32 %v202, 4294901760
        %v720 = vsub.f32 %v202, %v719
        %721 = vmatmul.mubr.f32.gmra.mxu0 %v720
        %v722 = vpop.f32.mrf.mxu0
        %v723 = vadd.f32 %v570, %v722
        %v724 = vpop.f32.mrf.mxu0
        %725 = vdwg.mxu0
        %726 = vmatprep.subr.mxu0 0.0
        %v727 = vand.u32 %v218, 4294901760
        %728 = vmatpush1.msra.mxu0 %v727
        %729 = vmatprep.subr.mxu0 0.0
        %v730 = vand.u32 %v217, 4294901760
        %731 = vmatpush1.msra.mxu0 %v730
        %732 = vmatprep.subr.mxu0 0.0
        %v733 = vand.u32 %v216, 4294901760
        %734 = vmatpush1.msra.mxu0 %v733
        %735 = vmatprep.subr.mxu0 0.0
        %v736 = vand.u32 %v215, 4294901760
        %737 = vmatpush1.msra.mxu0 %v736
        %738 = vmatprep.subr.mxu0 0.0
        %v739 = vand.u32 %v214, 4294901760
        %740 = vmatpush1.msra.mxu0 %v739
        %741 = vmatprep.subr.mxu0 0.0
        %v742 = vand.u32 %v213, 4294901760
        %743 = vmatpush1.msra.mxu0 %v742
        %744 = vmatprep.subr.mxu0 0.0
        %v745 = vand.u32 %v212, 4294901760
        %746 = vmatpush1.msra.mxu0 %v745
        %747 = vmatprep.subr.mxu0 0.0
        %v748 = vand.u32 %v211, 4294901760
        %749 = vmatpush1.msra.mxu0 %v748
        %750 = vmatprep.subr.mxu0 0.0
        %v751 = vand.u32 %v210, 4294901760
        %752 = vmatpush1.msra.mxu0 %v751
        %753 = vmatprep.subr.mxu0 0.0
        %v754 = vand.u32 %v209, 4294901760
        %755 = vmatpush1.msra.mxu0 %v754
        %756 = vmatprep.subr.mxu0 0.0
        %v757 = vand.u32 %v208, 4294901760
        %758 = vmatpush1.msra.mxu0 %v757
        %759 = vmatprep.subr.mxu0 0.0
        %v760 = vand.u32 %v207, 4294901760
        %761 = vmatpush1.msra.mxu0 %v760
        %762 = vmatprep.subr.mxu0 0.0
        %v763 = vand.u32 %v206, 4294901760
        %764 = vmatpush1.msra.mxu0 %v763
        %765 = vmatprep.subr.mxu0 0.0
        %v766 = vand.u32 %v205, 4294901760
        %767 = vmatpush1.msra.mxu0 %v766
        %768 = vmatprep.subr.mxu0 0.0
        %v769 = vand.u32 %v204, 4294901760
        %770 = vmatpush1.msra.mxu0 %v769
        %771 = vmatprep.subr.mxu0 0.0
        %v772 = vand.u32 %v203, 4294901760
        %773 = vmatpush1.msra.mxu0 %v772
        %774 = vmatprep.subr.mxu0 0.0
        %775 = vmatpush2.msra.mxu0 0.0
        %776 = vmatprep.subr.mxu0 0.0
        %777 = vmatpush2.msra.mxu0 0.0
        %778 = vmatprep.subr.mxu0 0.0
        %779 = vmatpush2.msra.mxu0 0.0
        %780 = vmatprep.subr.mxu0 0.0
        %781 = vmatpush2.msra.mxu0 0.0
        %782 = vmatprep.subr.mxu0 0.0
        %783 = vmatpush2.msra.mxu0 0.0
        %784 = vmatprep.subr.mxu0 0.0
        %785 = vmatpush2.msra.mxu0 0.0
        %786 = vmatprep.subr.mxu0 0.0
        %787 = vmatpush2.msra.mxu0 0.0
        %788 = vmatprep.subr.mxu0 0.0
        %789 = vmatpush2.msra.mxu0 0.0
        %790 = vmatprep.subr.mxu0 0.0
        %791 = vmatpush2.msra.mxu0 0.0
        %792 = vmatprep.subr.mxu0 0.0
        %793 = vmatpush2.msra.mxu0 0.0
        %794 = vmatprep.subr.mxu0 0.0
        %795 = vmatpush2.msra.mxu0 0.0
        %796 = vmatprep.subr.mxu0 0.0
        %797 = vmatpush2.msra.mxu0 0.0
        %798 = vmatprep.subr.mxu0 0.0
        %799 = vmatpush2.msra.mxu0 0.0
        %800 = vmatprep.subr.mxu0 0.0
        %801 = vmatpush2.msra.mxu0 0.0
        %802 = vmatprep.subr.mxu0 0.0
        %803 = vmatpush2.msra.mxu0 0.0
        %804 = vmatprep.subr.mxu0 0.0
        %805 = vmatpush2.msra.mxu0 0.0
        %806 = vmatprep.mubr.f32.mxu0 0.0
        %v807 = vand.u32 %v195, 4294901760
        %v808 = vsub.f32 %v195, %v807
        %v809 = vand.u32 %v808, 4294901760
        %810 = vmatmul.mubr.f32.gmra.mxu0 %v809
        %v811 = vpop.f32.mrf.mxu0
        %v812 = vadd.f32 %v674, %v811
        %v813 = vpop.f32.mrf.mxu0
        %814 = vmatprep.mubr.f32.mxu0 0.0
        %v815 = vand.u32 %v196, 4294901760
        %v816 = vsub.f32 %v196, %v815
        %v817 = vand.u32 %v816, 4294901760
        %818 = vmatmul.mubr.f32.gmra.mxu0 %v817
        %v819 = vpop.f32.mrf.mxu0
        %v820 = vadd.f32 %v681, %v819
        %v821 = vpop.f32.mrf.mxu0
        %822 = vmatprep.mubr.f32.mxu0 0.0
        %v823 = vand.u32 %v197, 4294901760
        %v824 = vsub.f32 %v197, %v823
        %v825 = vand.u32 %v824, 4294901760
        %826 = vmatmul.mubr.f32.gmra.mxu0 %v825
        %v827 = vpop.f32.mrf.mxu0
        %v828 = vadd.f32 %v688, %v827
        %v829 = vpop.f32.mrf.mxu0
        %830 = vmatprep.mubr.f32.mxu0 0.0
        %v831 = vand.u32 %v198, 4294901760
        %v832 = vsub.f32 %v198, %v831
        %v833 = vand.u32 %v832, 4294901760
        %834 = vmatmul.mubr.f32.gmra.mxu0 %v833
        %v835 = vpop.f32.mrf.mxu0
        %v836 = vadd.f32 %v695, %v835
        %v837 = vpop.f32.mrf.mxu0
        %838 = vmatprep.mubr.f32.mxu0 0.0
        %v839 = vand.u32 %v199, 4294901760
        %v840 = vsub.f32 %v199, %v839
        %v841 = vand.u32 %v840, 4294901760
        %842 = vmatmul.mubr.f32.gmra.mxu0 %v841
        %v843 = vpop.f32.mrf.mxu0
        %v844 = vadd.f32 %v702, %v843
        %v845 = vpop.f32.mrf.mxu0
        %846 = vmatprep.mubr.f32.mxu0 0.0
        %v847 = vand.u32 %v200, 4294901760
        %v848 = vsub.f32 %v200, %v847
        %v849 = vand.u32 %v848, 4294901760
        %850 = vmatmul.mubr.f32.gmra.mxu0 %v849
        %v851 = vpop.f32.mrf.mxu0
        %v852 = vadd.f32 %v709, %v851
        %v853 = vpop.f32.mrf.mxu0
        %854 = vmatprep.mubr.f32.mxu0 0.0
        %v855 = vand.u32 %v201, 4294901760
        %v856 = vsub.f32 %v201, %v855
        %v857 = vand.u32 %v856, 4294901760
        %858 = vmatmul.mubr.f32.gmra.mxu0 %v857
        %v859 = vpop.f32.mrf.mxu0
        %v860 = vadd.f32 %v716, %v859
        %v861 = vpop.f32.mrf.mxu0
        %862 = vmatprep.mubr.f32.mxu0 0.0
        %v863 = vand.u32 %v202, 4294901760
        %v864 = vsub.f32 %v202, %v863
        %v865 = vand.u32 %v864, 4294901760
        %866 = vmatmul.mubr.f32.gmra.mxu0 %v865
        %v867 = vpop.f32.mrf.mxu0
        %v868 = vadd.f32 %v723, %v867
        %v869 = vpop.f32.mrf.mxu0
        %870 = vdwg.mxu0
        %871 = vmatprep.subr.mxu0 0.0
        %v872 = vand.u32 %v218, 4294901760
        %v873 = vsub.f32 %v218, %v872
        %v874 = vand.u32 %v873, 4294901760
        %875 = vmatpush1.msra.mxu0 %v874
        %876 = vmatprep.subr.mxu0 0.0
        %v877 = vand.u32 %v217, 4294901760
        %v878 = vsub.f32 %v217, %v877
        %v879 = vand.u32 %v878, 4294901760
        %880 = vmatpush1.msra.mxu0 %v879
        %881 = vmatprep.subr.mxu0 0.0
        %v882 = vand.u32 %v216, 4294901760
        %v883 = vsub.f32 %v216, %v882
        %v884 = vand.u32 %v883, 4294901760
        %885 = vmatpush1.msra.mxu0 %v884
        %886 = vmatprep.subr.mxu0 0.0
        %v887 = vand.u32 %v215, 4294901760
        %v888 = vsub.f32 %v215, %v887
        %v889 = vand.u32 %v888, 4294901760
        %890 = vmatpush1.msra.mxu0 %v889
        %891 = vmatprep.subr.mxu0 0.0
        %v892 = vand.u32 %v214, 4294901760
        %v893 = vsub.f32 %v214, %v892
        %v894 = vand.u32 %v893, 4294901760
        %895 = vmatpush1.msra.mxu0 %v894
        %896 = vmatprep.subr.mxu0 0.0
        %v897 = vand.u32 %v213, 4294901760
        %v898 = vsub.f32 %v213, %v897
        %v899 = vand.u32 %v898, 4294901760
        %900 = vmatpush1.msra.mxu0 %v899
        %901 = vmatprep.subr.mxu0 0.0
        %v902 = vand.u32 %v212, 4294901760
        %v903 = vsub.f32 %v212, %v902
        %v904 = vand.u32 %v903, 4294901760
        %905 = vmatpush1.msra.mxu0 %v904
        %906 = vmatprep.subr.mxu0 0.0
        %v907 = vand.u32 %v211, 4294901760
        %v908 = vsub.f32 %v211, %v907
        %v909 = vand.u32 %v908, 4294901760
        %910 = vmatpush1.msra.mxu0 %v909
        %911 = vmatprep.subr.mxu0 0.0
        %v912 = vand.u32 %v210, 4294901760
        %v913 = vsub.f32 %v210, %v912
        %v914 = vand.u32 %v913, 4294901760
        %915 = vmatpush1.msra.mxu0 %v914
        %916 = vmatprep.subr.mxu0 0.0
        %v917 = vand.u32 %v209, 4294901760
        %v918 = vsub.f32 %v209, %v917
        %v919 = vand.u32 %v918, 4294901760
        %920 = vmatpush1.msra.mxu0 %v919
        %921 = vmatprep.subr.mxu0 0.0
        %v922 = vand.u32 %v208, 4294901760
        %v923 = vsub.f32 %v208, %v922
        %v924 = vand.u32 %v923, 4294901760
        %925 = vmatpush1.msra.mxu0 %v924
        %926 = vmatprep.subr.mxu0 0.0
        %v927 = vand.u32 %v207, 4294901760
        %v928 = vsub.f32 %v207, %v927
        %v929 = vand.u32 %v928, 4294901760
        %930 = vmatpush1.msra.mxu0 %v929
        %931 = vmatprep.subr.mxu0 0.0
        %v932 = vand.u32 %v206, 4294901760
        %v933 = vsub.f32 %v206, %v932
        %v934 = vand.u32 %v933, 4294901760
        %935 = vmatpush1.msra.mxu0 %v934
        %936 = vmatprep.subr.mxu0 0.0
        %v937 = vand.u32 %v205, 4294901760
        %v938 = vsub.f32 %v205, %v937
        %v939 = vand.u32 %v938, 4294901760
        %940 = vmatpush1.msra.mxu0 %v939
        %941 = vmatprep.subr.mxu0 0.0
        %v942 = vand.u32 %v204, 4294901760
        %v943 = vsub.f32 %v204, %v942
        %v944 = vand.u32 %v943, 4294901760
        %945 = vmatpush1.msra.mxu0 %v944
        %946 = vmatprep.subr.mxu0 0.0
        %v947 = vand.u32 %v203, 4294901760
        %v948 = vsub.f32 %v203, %v947
        %v949 = vand.u32 %v948, 4294901760
        %950 = vmatpush1.msra.mxu0 %v949
        %951 = vmatprep.subr.mxu0 0.0
        %952 = vmatpush2.msra.mxu0 0.0
        %953 = vmatprep.subr.mxu0 0.0
        %954 = vmatpush2.msra.mxu0 0.0
        %955 = vmatprep.subr.mxu0 0.0
        %956 = vmatpush2.msra.mxu0 0.0
        %957 = vmatprep.subr.mxu0 0.0
        %958 = vmatpush2.msra.mxu0 0.0
        %959 = vmatprep.subr.mxu0 0.0
        %960 = vmatpush2.msra.mxu0 0.0
        %961 = vmatprep.subr.mxu0 0.0
        %962 = vmatpush2.msra.mxu0 0.0
        %963 = vmatprep.subr.mxu0 0.0
        %964 = vmatpush2.msra.mxu0 0.0
        %965 = vmatprep.subr.mxu0 0.0
        %966 = vmatpush2.msra.mxu0 0.0
        %967 = vmatprep.subr.mxu0 0.0
        %968 = vmatpush2.msra.mxu0 0.0
        %969 = vmatprep.subr.mxu0 0.0
        %970 = vmatpush2.msra.mxu0 0.0
        %971 = vmatprep.subr.mxu0 0.0
        %972 = vmatpush2.msra.mxu0 0.0
        %973 = vmatprep.subr.mxu0 0.0
        %974 = vmatpush2.msra.mxu0 0.0
        %975 = vmatprep.subr.mxu0 0.0
        %976 = vmatpush2.msra.mxu0 0.0
        %977 = vmatprep.subr.mxu0 0.0
        %978 = vmatpush2.msra.mxu0 0.0
        %979 = vmatprep.subr.mxu0 0.0
        %980 = vmatpush2.msra.mxu0 0.0
        %981 = vmatprep.subr.mxu0 0.0
        %982 = vmatpush2.msra.mxu0 0.0
        %983 = vmatprep.mubr.f32.mxu0 0.0
        %v984 = vand.u32 %v195, 4294901760
        %985 = vmatmul.mubr.f32.gmra.mxu0 %v984
        %v986 = vpop.f32.mrf.mxu0
        %v987 = vadd.f32 %v812, %v986
        %v988 = vpop.f32.mrf.mxu0
        %989 = vmatprep.mubr.f32.mxu0 0.0
        %v990 = vand.u32 %v196, 4294901760
        %991 = vmatmul.mubr.f32.gmra.mxu0 %v990
        %v992 = vpop.f32.mrf.mxu0
        %v993 = vadd.f32 %v820, %v992
        %v994 = vpop.f32.mrf.mxu0
        %995 = vmatprep.mubr.f32.mxu0 0.0
        %v996 = vand.u32 %v197, 4294901760
        %997 = vmatmul.mubr.f32.gmra.mxu0 %v996
        %v998 = vpop.f32.mrf.mxu0
        %v999 = vadd.f32 %v828, %v998
        %v1000 = vpop.f32.mrf.mxu0
        %1001 = vmatprep.mubr.f32.mxu0 0.0
        %v1002 = vand.u32 %v198, 4294901760
        %1003 = vmatmul.mubr.f32.gmra.mxu0 %v1002
        %v1004 = vpop.f32.mrf.mxu0
        %v1005 = vadd.f32 %v836, %v1004
        %v1006 = vpop.f32.mrf.mxu0
        %1007 = vmatprep.mubr.f32.mxu0 0.0
        %v1008 = vand.u32 %v199, 4294901760
        %1009 = vmatmul.mubr.f32.gmra.mxu0 %v1008
        %v1010 = vpop.f32.mrf.mxu0
        %v1011 = vadd.f32 %v844, %v1010
        %v1012 = vpop.f32.mrf.mxu0
        %1013 = vmatprep.mubr.f32.mxu0 0.0
        %v1014 = vand.u32 %v200, 4294901760
        %1015 = vmatmul.mubr.f32.gmra.mxu0 %v1014
        %v1016 = vpop.f32.mrf.mxu0
        %v1017 = vadd.f32 %v852, %v1016
        %v1018 = vpop.f32.mrf.mxu0
        %1019 = vmatprep.mubr.f32.mxu0 0.0
        %v1020 = vand.u32 %v201, 4294901760
        %1021 = vmatmul.mubr.f32.gmra.mxu0 %v1020
        %v1022 = vpop.f32.mrf.mxu0
        %v1023 = vadd.f32 %v860, %v1022
        %v1024 = vpop.f32.mrf.mxu0
        %1025 = vmatprep.mubr.f32.mxu0 0.0
        %v1026 = vand.u32 %v202, 4294901760
        %1027 = vmatmul.mubr.f32.gmra.mxu0 %v1026
        %v1028 = vpop.f32.mrf.mxu0
        %v1029 = vadd.f32 %v868, %v1028
        %v1030 = vpop.f32.mrf.mxu0
        %1031 = vdwg.mxu0
        %1032 = vmatprep.subr.mxu0 0.0
        %v1033 = vand.u32 %v218, 4294901760
        %1034 = vmatpush1.msra.mxu0 %v1033
        %1035 = vmatprep.subr.mxu0 0.0
        %v1036 = vand.u32 %v217, 4294901760
        %1037 = vmatpush1.msra.mxu0 %v1036
        %1038 = vmatprep.subr.mxu0 0.0
        %v1039 = vand.u32 %v216, 4294901760
        %1040 = vmatpush1.msra.mxu0 %v1039
        %1041 = vmatprep.subr.mxu0 0.0
        %v1042 = vand.u32 %v215, 4294901760
        %1043 = vmatpush1.msra.mxu0 %v1042
        %1044 = vmatprep.subr.mxu0 0.0
        %v1045 = vand.u32 %v214, 4294901760
        %1046 = vmatpush1.msra.mxu0 %v1045
        %1047 = vmatprep.subr.mxu0 0.0
        %v1048 = vand.u32 %v213, 4294901760
        %1049 = vmatpush1.msra.mxu0 %v1048
        %1050 = vmatprep.subr.mxu0 0.0
        %v1051 = vand.u32 %v212, 4294901760
        %1052 = vmatpush1.msra.mxu0 %v1051
        %1053 = vmatprep.subr.mxu0 0.0
        %v1054 = vand.u32 %v211, 4294901760
        %1055 = vmatpush1.msra.mxu0 %v1054
        %1056 = vmatprep.subr.mxu0 0.0
        %v1057 = vand.u32 %v210, 4294901760
        %1058 = vmatpush1.msra.mxu0 %v1057
        %1059 = vmatprep.subr.mxu0 0.0
        %v1060 = vand.u32 %v209, 4294901760
        %1061 = vmatpush1.msra.mxu0 %v1060
        %1062 = vmatprep.subr.mxu0 0.0
        %v1063 = vand.u32 %v208, 4294901760
        %1064 = vmatpush1.msra.mxu0 %v1063
        %1065 = vmatprep.subr.mxu0 0.0
        %v1066 = vand.u32 %v207, 4294901760
        %1067 = vmatpush1.msra.mxu0 %v1066
        %1068 = vmatprep.subr.mxu0 0.0
        %v1069 = vand.u32 %v206, 4294901760
        %1070 = vmatpush1.msra.mxu0 %v1069
        %1071 = vmatprep.subr.mxu0 0.0
        %v1072 = vand.u32 %v205, 4294901760
        %1073 = vmatpush1.msra.mxu0 %v1072
        %1074 = vmatprep.subr.mxu0 0.0
        %v1075 = vand.u32 %v204, 4294901760
        %1076 = vmatpush1.msra.mxu0 %v1075
        %1077 = vmatprep.subr.mxu0 0.0
        %v1078 = vand.u32 %v203, 4294901760
        %1079 = vmatpush1.msra.mxu0 %v1078
        %1080 = vmatprep.subr.mxu0 0.0
        %1081 = vmatpush2.msra.mxu0 0.0
        %1082 = vmatprep.subr.mxu0 0.0
        %1083 = vmatpush2.msra.mxu0 0.0
        %1084 = vmatprep.subr.mxu0 0.0
        %1085 = vmatpush2.msra.mxu0 0.0
        %1086 = vmatprep.subr.mxu0 0.0
        %1087 = vmatpush2.msra.mxu0 0.0
        %1088 = vmatprep.subr.mxu0 0.0
        %1089 = vmatpush2.msra.mxu0 0.0
        %1090 = vmatprep.subr.mxu0 0.0
        %1091 = vmatpush2.msra.mxu0 0.0
        %1092 = vmatprep.subr.mxu0 0.0
        %1093 = vmatpush2.msra.mxu0 0.0
        %1094 = vmatprep.subr.mxu0 0.0
        %1095 = vmatpush2.msra.mxu0 0.0
        %1096 = vmatprep.subr.mxu0 0.0
        %1097 = vmatpush2.msra.mxu0 0.0
        %1098 = vmatprep.subr.mxu0 0.0
        %1099 = vmatpush2.msra.mxu0 0.0
        %1100 = vmatprep.subr.mxu0 0.0
        %1101 = vmatpush2.msra.mxu0 0.0
        %1102 = vmatprep.subr.mxu0 0.0
        %1103 = vmatpush2.msra.mxu0 0.0
        %1104 = vmatprep.subr.mxu0 0.0
        %1105 = vmatpush2.msra.mxu0 0.0
        %1106 = vmatprep.subr.mxu0 0.0
        %1107 = vmatpush2.msra.mxu0 0.0
        %1108 = vmatprep.subr.mxu0 0.0
        %1109 = vmatpush2.msra.mxu0 0.0
        %1110 = vmatprep.subr.mxu0 0.0
        %1111 = vmatpush2.msra.mxu0 0.0
        %1112 = vmatprep.mubr.f32.mxu0 0.0
        %v1113 = vand.u32 %v195, 4294901760
        %1114 = vmatmul.mubr.f32.gmra.mxu0 %v1113
        %v1115 = vpop.f32.mrf.mxu0
        %v1116 = vadd.f32 %v987, %v1115
        %v1117 = vpop.f32.mrf.mxu0
        %1118 = vmatprep.mubr.f32.mxu0 0.0
        %v1119 = vand.u32 %v196, 4294901760
        %1120 = vmatmul.mubr.f32.gmra.mxu0 %v1119
        %v1121 = vpop.f32.mrf.mxu0
        %v1122 = vadd.f32 %v993, %v1121
        %v1123 = vpop.f32.mrf.mxu0
        %1124 = vmatprep.mubr.f32.mxu0 0.0
        %v1125 = vand.u32 %v197, 4294901760
        %1126 = vmatmul.mubr.f32.gmra.mxu0 %v1125
        %v1127 = vpop.f32.mrf.mxu0
        %v1128 = vadd.f32 %v999, %v1127
        %v1129 = vpop.f32.mrf.mxu0
        %1130 = vmatprep.mubr.f32.mxu0 0.0
        %v1131 = vand.u32 %v198, 4294901760
        %1132 = vmatmul.mubr.f32.gmra.mxu0 %v1131
        %v1133 = vpop.f32.mrf.mxu0
        %v1134 = vadd.f32 %v1005, %v1133
        %v1135 = vpop.f32.mrf.mxu0
        %1136 = vmatprep.mubr.f32.mxu0 0.0
        %v1137 = vand.u32 %v199, 4294901760
        %1138 = vmatmul.mubr.f32.gmra.mxu0 %v1137
        %v1139 = vpop.f32.mrf.mxu0
        %v1140 = vadd.f32 %v1011, %v1139
        %v1141 = vpop.f32.mrf.mxu0
        %1142 = vmatprep.mubr.f32.mxu0 0.0
        %v1143 = vand.u32 %v200, 4294901760
        %1144 = vmatmul.mubr.f32.gmra.mxu0 %v1143
        %v1145 = vpop.f32.mrf.mxu0
        %v1146 = vadd.f32 %v1017, %v1145
        %v1147 = vpop.f32.mrf.mxu0
        %1148 = vmatprep.mubr.f32.mxu0 0.0
        %v1149 = vand.u32 %v201, 4294901760
        %1150 = vmatmul.mubr.f32.gmra.mxu0 %v1149
        %v1151 = vpop.f32.mrf.mxu0
        %v1152 = vadd.f32 %v1023, %v1151
        %v1153 = vpop.f32.mrf.mxu0
        %1154 = vmatprep.mubr.f32.mxu0 0.0
        %v1155 = vand.u32 %v202, 4294901760
        %1156 = vmatmul.mubr.f32.gmra.mxu0 %v1155
        %v1157 = vpop.f32.mrf.mxu0
        %v1158 = vadd.f32 %v1029, %v1157
        %v1159 = vpop.f32.mrf.mxu0
        %1160 = vdwg.mxu0
        %1161 = vst [vmem:[%s137] sm:$0xff] %v1116
        %1162 = vst [vmem:[%s137 + $0x8] sm:$0xff] %v1122
        %1163 = vst [vmem:[%s137 + $0x10] sm:$0xff] %v1128
        %1164 = vst [vmem:[%s137 + $0x18] sm:$0xff] %v1134
        %1165 = vst [vmem:[%s137 + $0x20] sm:$0xff] %v1140
        %1166 = vst [vmem:[%s137 + $0x28] sm:$0xff] %v1146
        %1167 = vst [vmem:[%s137 + $0x30] sm:$0xff] %v1152
        %1168 = vst [vmem:[%s137 + $0x38] sm:$0xff] %v1158
        %s1169 = sand.u32 %s71, 1
        %s1170 = scalar_lea.sflag [#allocation3], %s1169
        %s1171 = sand.u32 %s71, 1
        %s1172 = smul.addr %s1171, 64
        %s1173 = scalar_lea.vmem [#allocation2], %s1172
        // Predicated region
        $region29: #{embedding_lookup.1} parent=27 // pred_check
          %p1174 = pneg %p81
        $region30: #{embedding_lookup.1} parent=27 // pred_check_branch
          %1176 = sbr.rel (%p1174) target = $region32
        $region31: #{embedding_lookup.1} parent=27 // pred_region
          %s1177 = smul.u32 8, %s16
          %s1179 = ssub.s32 1024, 1024
          %1180 = vsyncadd %s1170, %s1179
          %s1181 = smul.addr %s1177, 128
          %s1182 = scalar_lea.hbm %s2, %s1181
          %s1183 = sshll.u32 %s1173, 4
          %s1184 = int_to_ptr.vmem [resolvable:$true] %s1183
          %1189 = dma.vmem_to_hbm [thread:$0]  %s1184, 1024, %s1182, %s1170, 128, 128, 8
        $region32: #{embedding_lookup.1} parent=27 // pred_fallthru
          _
      $region28: #{embedding_lookup.1} parent=5 // pred_fallthru
        _
      %p1190 = scmp.le.s32.totalorder 2, %s11
      // Predicated region
      $region33: #{embedding_lookup.1} parent=5 // pred_check
        %p1191 = pneg %p1190
      $region34: #{embedding_lookup.1} parent=5 // pred_check_branch
        %1193 = sbr.rel (%p1191) target = $region36
      $region35: #{embedding_lookup.1} parent=5 // pred_region
        %s1194 = ssub.s32 %s11, 2
        // Predicated region
        $region37: #{embedding_lookup.1} parent=35 // pred_check
          %p1195 = pneg %p87
        $region38: #{embedding_lookup.1} parent=35 // pred_check_branch
          %1197 = sbr.rel (%p1195) target = $region40
        $region39: #{embedding_lookup.1} parent=35 // pred_region
          %s1198 = sand.u32 %s72, 1
          %s1199 = scalar_lea.sflag [#allocation3], %s1198
          %s1200 = sand.u32 %s72, 1
          %s1201 = smul.addr %s1200, 64
          %s1202 = scalar_lea.vmem [#allocation2], %s1201
          %1203 = dma.done %s1199, 1024
        $region40: #{embedding_lookup.1} parent=35 // pred_fallthru
          _
      $region36: #{embedding_lookup.1} parent=5 // pred_fallthru
        _
    $region6: #{embedding_lookup.1} parent=1 // loop_footer
      %s15 = sadd.s32 1, %s11
    $region7: #{embedding_lookup.1} parent=1 // loop_footer_branch
      %10 = sbr.rel target = $region3
    $region8: #{embedding_lookup.1} parent=1 // loop_exit
      _
    %1204 = vsyncpa [#allocation3], 1
    %s1205 = scalar_lea.sflag [#allocation3], 1
    %1206 = vsyncpa %s1205, 1

</llo_original>
